<compile_context>
chip_gen: v7x
topology: tpu7x:2x2x1
jax: 0.10.0
libtpu: 0.0.40
codegen_flags: <defaults>
</compile_context>

<pallas_src>
import jax
import jax.numpy as jnp
from jax.experimental import pallas as pl
from jax.experimental.pallas import tpu as pltpu


_MAX_COLS = 4096                  # lane-dense: large multiple of 128 -> unmasked vst
_TARGET_BLOCK_BYTES = 4 << 20     # ~4 MiB/block; x4 (2 in + 2 out dbl-buffered) = 16 MiB
_VMEM_LIMIT_BYTES = 32 << 20      # explicit scoped-VMEM limit; safe on v5e/v6e/v7x


def _copy_kernel(x_ref, o_ref):
    # Pure tiled copy; all reshaping happens (for free) in the wrapper.
    o_ref[...] = x_ref[...]


def _sublane_multiple(dtype) -> int:
    # Packed dtypes tile sublanes in pairs/quads: f32 -> 8, bf16 -> 16, int8/fp8 -> 32.
    itemsize = jnp.dtype(dtype).itemsize
    return max(8, 32 // max(1, itemsize))


def _pick_cols(total: int, sublane: int):
    """Largest multiple-of-128 column count <= _MAX_COLS dividing `total`, preferring
    candidates that keep rows = total // cols >= sublane (full packed vregs)."""
    if total % 128 != 0:
        return None
    best_full = None   # rows >= sublane
    best_any = None    # any divisor (rows may be < sublane; small inputs only)
    c = 128
    while c <= _MAX_COLS and c <= total:
        if total % c == 0:
            best_any = c
            if total // c >= sublane:
                best_full = c
        c += 128
    return best_full if best_full is not None else best_any


def _pick_block_rows(rows: int, cols: int, itemsize: int, sublane: int) -> int:
    """Row block sized by VMEM budget (~_TARGET_BLOCK_BYTES), a multiple of the
    dtype sublane packing, and (when rows allow) leaving >= 2 grid steps so the
    'parallel' axis can actually be split across TensorCores (v7x)."""
    row_bytes = cols * itemsize
    br = max(sublane, _TARGET_BLOCK_BYTES // max(1, row_bytes))
    br = min(br, rows)
    # Keep the grid >= 2 when rows permit a full-sublane split (megacore on v7x).
    if br >= rows and rows >= 2 * sublane:
        br = (rows + 1) // 2
    if br < rows:
        br = max(sublane, (br // sublane) * sublane)
    return min(br, rows)


@jax.jit
def flatten(x: jax.Array) -> jax.Array:
    """Equivalent of PyTorch Flatten().forward(x): x.view(N, -1)."""
    n = x.shape[0]
    flat = 1
    for d in x.shape[1:]:
        flat *= d
    total = n * flat
    itemsize = jnp.dtype(x.dtype).itemsize
    sublane = _sublane_multiple(x.dtype)

    # Metadata-only flatten (free in XLA).
    x2d = jnp.reshape(x, (n, flat))

    # Pure HBM-bound copy: 1 read + 1 write of the whole tensor, zero FLOPs.
    cost = pl.CostEstimate(flops=0, transcendentals=0,
                           bytes_accessed=2 * total * itemsize)

    cols = _pick_cols(total, sublane)
    if cols is None:
        # Irregular total (not a multiple of 128): tile along the batch dim with
        # the trailing block dim equal to the full `flat` extent (always legal),
        # so the copy stays double-buffered and never stages everything in VMEM.
        row_bytes = flat * itemsize
        block_n = max(1, _TARGET_BLOCK_BYTES // max(1, row_bytes))
        block_n = min(block_n, n)
        if block_n < n:
            block_n = min(n, max(8, (block_n // 8) * 8))
        vmem_limit = min(max(_VMEM_LIMIT_BYTES,
                             4 * block_n * row_bytes + (2 << 20)), 64 << 20)
        return pl.pallas_call(
            _copy_kernel,
            out_shape=jax.ShapeDtypeStruct((n, flat), x.dtype),
            grid=(pl.cdiv(n, block_n),),
            in_specs=[pl.BlockSpec((block_n, flat), lambda i: (i, 0))],
            out_specs=pl.BlockSpec((block_n, flat), lambda i: (i, 0)),
            compiler_params=pltpu.CompilerParams(
                dimension_semantics=("parallel",),
                vmem_limit_bytes=vmem_limit),
            cost_estimate=cost,
        )(x2d)

    # Lane-dense 2D slab: rows x cols with cols a large multiple of 128 and
    # (whenever possible) rows >= sublane so every packed vreg is full.
    rows = total // cols
    slab = jnp.reshape(x2d, (rows, cols))
    block_rows = _pick_block_rows(rows, cols, itemsize, sublane)
    grid = (pl.cdiv(rows, block_rows),)

    out = pl.pallas_call(
        _copy_kernel,
        out_shape=jax.ShapeDtypeStruct((rows, cols), x.dtype),
        grid=grid,
        in_specs=[pl.BlockSpec((block_rows, cols), lambda i: (i, 0))],
        out_specs=pl.BlockSpec((block_rows, cols), lambda i: (i, 0)),
        compiler_params=pltpu.CompilerParams(
            dimension_semantics=("parallel",),
            vmem_limit_bytes=_VMEM_LIMIT_BYTES),
        cost_estimate=cost,
    )(slab)

    return jnp.reshape(out, (n, flat))


if __name__ == "__main__":
    key = jax.random.PRNGKey(0)
    # Small NCHW input consistent with a conv backbone feature map.
    x = jax.random.normal(key, (2, 4, 16, 16), dtype=jnp.float32)

    y = flatten(x)
    jax.block_until_ready(y)

    # Correctness check against plain JAX reshape (same semantics as .view(N, -1)).
    ref = jnp.reshape(x, (x.shape[0], -1))
    assert y.shape == (2, 4 * 16 * 16), y.shape
    assert y.dtype == x.dtype
    assert jnp.array_equal(y, ref), "Pallas flatten mismatch vs reference reshape"

    # Also exercise the irregular-size fallback path (total not a multiple of 128).
    x_odd = jax.random.normal(key, (3, 5, 7), dtype=jnp.float32)
    y_odd = flatten(x_odd)
    jax.block_until_ready(y_odd)
    assert jnp.array_equal(y_odd, jnp.reshape(x_odd, (3, -1)))

    print("KERNEL_OK")
</pallas_src>

<mosaic_0001>
module attributes {stable_mosaic.version = 11 : i64} {
  func.func @_copy_kernel(%arg0: i32, %arg1: memref<8x256xf32, #tpu.memory_space<vmem>>, %arg2: memref<8x256xf32, #tpu.memory_space<vmem>>) attributes {dimension_semantics = [#tpu.dimension_semantics<parallel>], iteration_bounds = array<i64: 1>, scalar_prefetch = 0 : i64, scratch_operands = 0 : i64, tpu.core_type = #tpu.core_type<tc>, window_params = [{transform_indices = @transform_0, window_bounds = array<i64: 8, 256>}, {transform_indices = @transform_1, window_bounds = array<i64: 8, 256>}]} {
    %c0 = arith.constant 0 : index
    %c0_0 = arith.constant 0 : index
    %0 = vector.load %arg1[%c0, %c0_0] : memref<8x256xf32, #tpu.memory_space<vmem>>, vector<8x256xf32>
    %c0_1 = arith.constant 0 : index
    %c0_2 = arith.constant 0 : index
    %1 = vector.load %arg2[%c0_1, %c0_2] : memref<8x256xf32, #tpu.memory_space<vmem>>, vector<8x256xf32>
    tpu.vector_store %arg2[%c0_1, %c0_2], %0 {strides = array<i32>} : memref<8x256xf32, #tpu.memory_space<vmem>>, vector<8x256xf32>,
    return
  }
  func.func @transform_0(%arg0: i32) -> (i32, i32) {
    %c0_i32 = arith.constant 0 : i32
    %c0_i32_0 = arith.constant 0 : i32
    return %arg0, %c0_i32 : i32, i32
  }
  func.func @transform_1(%arg0: i32) -> (i32, i32) {
    %c0_i32 = arith.constant 0 : i32
    %c0_i32_0 = arith.constant 0 : i32
    return %arg0, %c0_i32 : i32, i32
  }
}

</mosaic_0001>

<llo_original>
// kernel: flatten.1
$region0: #{flatten.1}
  #allocation0 [shape = 'u32[]', space=smem, size = 0x4, offset = 0x4, fixed_abs, tag = 'smem constant byte address 0x4 - core index']
  #allocation1 [shape = 'u32[144,128]{1,0:T(1,128)}', space=vmem, size = 0x12000, scoped, tag = 'internal scratch']
  %s0 = inlined_call_operand.vmem [shape: f32[8,256], index: 0, kind: input, shape index: {}]
  %s1 = inlined_call_operand.vmem [shape: f32[8,256], index: 1, kind: output, shape index: {}]
  %s2 = sld [smem:[#allocation0]]
  $region14: #{flatten.1} parent=0
    _
  %s4 = ssub.s32 1, %s2
  %s5 = scalar_select 0, %s4, %s2
  // Predicated region
  $region2: #{flatten.1} parent=0 // pred_check
    _
  $region3: #{flatten.1} parent=0 // pred_check_branch
    %7 = sbr.rel (0) target = $region5
  $region4: #{flatten.1} parent=0 // pred_region
    _
  $region5: #{flatten.1} parent=0 // pred_fallthru
    _
  %v8 = vld [vmem:[%s0] sm:$0xff]
  %v9 = vld [vmem:[%s0 + $0x8] sm:$0xff]
  %10 = vst [vmem:[%s1] sm:$0xff] %v8
  %11 = vst [vmem:[%s1 + $0x8] sm:$0xff] %v9
  // Predicated region
  $region6: #{flatten.1} parent=0 // pred_check
    _
  $region7: #{flatten.1} parent=0 // pred_check_branch
    %13 = sbr.rel (0) target = $region9
  $region8: #{flatten.1} parent=0 // pred_region
    _
  $region9: #{flatten.1} parent=0 // pred_fallthru
    _
  // Predicated region
  $region10: #{flatten.1} parent=0 // pred_check
    _
  $region11: #{flatten.1} parent=0 // pred_check_branch
    %15 = sbr.rel (0) target = $region13
  $region12: #{flatten.1} parent=0 // pred_region
    _
  $region13: #{flatten.1} parent=0 // pred_fallthru
    _

</llo_original>
